<compile_context>
chip_gen: v6e
topology: v6e:2x2x1
jax: 0.10.0
libtpu: 0.0.40
codegen_flags: <defaults>
</compile_context>

<pallas_src>
import jax
import jax.numpy as jnp
from jax.experimental import pallas as pl
from jax.experimental.pallas import tpu as pltpu

_LANE = 128
_SUBLANE = 8


def _round_up(n, m):
    return (n + m - 1) // m * m


def _mlp_kernel(x_ref,
                w1_ref, b1_ref, w2_ref, b2_ref, w3_ref, b3_ref,
                w4_ref, b4_ref, w5_ref, b5_ref, w6_ref, b6_ref,
                o_ref):
    # bf16 matmul operands on the MXU, f32 accumulation; all elementwise in f32.
    def linear(h, w_ref, b_ref):
        return jnp.dot(h.astype(jnp.bfloat16), w_ref[...],
                       preferred_element_type=jnp.float32) + b_ref[...]

    h = x_ref[...]
    h = jnp.maximum(linear(h, w1_ref, b1_ref), 0.0)
    h = jnp.maximum(linear(h, w2_ref, b2_ref), 0.0)
    h = jnp.maximum(linear(h, w3_ref, b3_ref), 0.0)
    h = jnp.maximum(linear(h, w4_ref, b4_ref), 0.0)
    h = jnp.maximum(linear(h, w5_ref, b5_ref), 0.0)
    o_ref[...] = jax.nn.sigmoid(linear(h, w6_ref, b6_ref)).astype(o_ref.dtype)


def net_forward(x, params, *, block_batch=256, vmem_limit_bytes=32 * 1024 * 1024):
    """x: (batch, input_size) f32; params: list of (W (in,out) f32, b (1,out) f32)."""
    batch, input_size = x.shape
    num_classes = params[-1][0].shape[1]

    # ---- batch tiling -------------------------------------------------------
    if batch <= block_batch:
        tb = _round_up(batch, _SUBLANE)
    else:
        tb = block_batch
    padded_batch = _round_up(batch, tb)
    if padded_batch != batch:
        x = jnp.pad(x, ((0, padded_batch - batch), (0, 0)))

    # ---- lane-dense output (pad num_classes to a multiple of 128) ----------
    padded_classes = _round_up(num_classes, _LANE)

    # ---- weights -> bf16, biases stay f32; pad last layer on its N dim -----
    flat = []
    dims = []
    n_layers = len(params)
    for li, (w, b) in enumerate(params):
        wb = w.astype(jnp.bfloat16)
        bb = b.astype(jnp.float32).reshape(1, -1)
        if li == n_layers - 1 and padded_classes != num_classes:
            wb = jnp.pad(wb, ((0, 0), (0, padded_classes - num_classes)))
            bb = jnp.pad(bb, ((0, 0), (0, padded_classes - num_classes)))
        dims.append((wb.shape[0], wb.shape[1]))
        flat.append(wb)
        flat.append(bb)

    grid = (padded_batch // tb,)

    x_spec = pl.BlockSpec((tb, input_size), lambda i: (i, 0))
    param_specs = []
    for w, b in zip(flat[0::2], flat[1::2]):
        # Single full block, same for every grid step -> stays VMEM-resident.
        param_specs.append(pl.BlockSpec(w.shape, lambda i: (0, 0)))
        param_specs.append(pl.BlockSpec(b.shape, lambda i: (0, 0)))
    out_spec = pl.BlockSpec((tb, padded_classes), lambda i: (i, 0))

    flops = 2 * padded_batch * sum(ci * co for ci, co in dims)
    bytes_accessed = (padded_batch * (input_size + padded_classes) * 4
                      + sum(int(a.size) * a.dtype.itemsize for a in flat))
    cost = pl.CostEstimate(flops=flops,
                           transcendentals=padded_batch * padded_classes,
                           bytes_accessed=bytes_accessed)

    out = pl.pallas_call(
        _mlp_kernel,
        out_shape=jax.ShapeDtypeStruct((padded_batch, padded_classes), jnp.float32),
        grid=grid,
        in_specs=[x_spec] + param_specs,
        out_specs=out_spec,
        compiler_params=pltpu.CompilerParams(
            dimension_semantics=("parallel",),
            vmem_limit_bytes=vmem_limit_bytes,
        ),
        cost_estimate=cost,
    )(x, *flat)

    return out[:batch, :num_classes]


def init_params(key, input_size, num_classes):
    """Deterministic init mimicking PyTorch nn.Linear's U(-1/sqrt(fan_in), 1/sqrt(fan_in))."""
    dims = [input_size, 128, 64, 32, 64, 128, num_classes]
    params = []
    for i in range(6):
        fan_in, fan_out = dims[i], dims[i + 1]
        key, kw, kb = jax.random.split(key, 3)
        bound = 1.0 / jnp.sqrt(fan_in)
        # Stored as (in, out) == transpose of PyTorch's (out, in) weight.
        w = jax.random.uniform(kw, (fan_in, fan_out), jnp.float32, -bound, bound)
        b = jax.random.uniform(kb, (1, fan_out), jnp.float32, -bound, bound)
        params.append((w, b))
    return params


def reference_forward(x, params):
    """Pure-JAX reference using the same bf16 matmul operands / f32 accumulation."""
    h = x
    for i, (w, b) in enumerate(params):
        h = jnp.dot(h.astype(jnp.bfloat16), w.astype(jnp.bfloat16),
                    preferred_element_type=jnp.float32) + b.reshape(1, -1)
        h = jax.nn.sigmoid(h) if i == len(params) - 1 else jnp.maximum(h, 0.0)
    return h


if __name__ == "__main__":
    key = jax.random.PRNGKey(0)
    key, kx1, kx2 = jax.random.split(key, 3)

    input_size, num_classes = 32, 16
    params = init_params(key, input_size, num_classes)

    # Small case: single grid step, batch rounded to the sublane multiple.
    batch = 8
    x = jax.random.normal(kx1, (batch, input_size), jnp.float32)
    out = jax.block_until_ready(net_forward(x, params))
    ref = reference_forward(x, params)
    assert out.shape == (batch, num_classes)
    assert jnp.allclose(out, ref, atol=1e-4, rtol=1e-4)

    # Larger case: exercises batch tiling (TB=256), tail padding and slicing.
    batch2 = 260
    x2 = jax.random.normal(kx2, (batch2, input_size), jnp.float32)
    out2 = jax.block_until_ready(net_forward(x2, params))
    ref2 = reference_forward(x2, params)
    assert out2.shape == (batch2, num_classes)
    assert jnp.allclose(out2, ref2, atol=1e-4, rtol=1e-4)

    print("KERNEL_OK")
</pallas_src>

<mosaic_0001>
module attributes {stable_mosaic.version = 11 : i64} {
  func.func @_mlp_kernel(%arg0: i32, %arg1: memref<8x32xf32, #tpu.memory_space<vmem>>, %arg2: memref<32x128xbf16, #tpu.memory_space<vmem>>, %arg3: memref<1x128xf32, #tpu.memory_space<vmem>>, %arg4: memref<128x64xbf16, #tpu.memory_space<vmem>>, %arg5: memref<1x64xf32, #tpu.memory_space<vmem>>, %arg6: memref<64x32xbf16, #tpu.memory_space<vmem>>, %arg7: memref<1x32xf32, #tpu.memory_space<vmem>>, %arg8: memref<32x64xbf16, #tpu.memory_space<vmem>>, %arg9: memref<1x64xf32, #tpu.memory_space<vmem>>, %arg10: memref<64x128xbf16, #tpu.memory_space<vmem>>, %arg11: memref<1x128xf32, #tpu.memory_space<vmem>>, %arg12: memref<128x128xbf16, #tpu.memory_space<vmem>>, %arg13: memref<1x128xf32, #tpu.memory_space<vmem>>, %arg14: memref<8x128xf32, #tpu.memory_space<vmem>>) attributes {dimension_semantics = [#tpu.dimension_semantics<parallel>], iteration_bounds = array<i64: 1>, scalar_prefetch = 0 : i64, scratch_operands = 0 : i64, tpu.core_type = #tpu.core_type<tc>, window_params = [{transform_indices = @transform_0, window_bounds = array<i64: 8, 32>}, {pipeline_mode = #tpu.pipeline_mode<synchronous>, transform_indices = @transform_1, window_bounds = array<i64: 32, 128>}, {pipeline_mode = #tpu.pipeline_mode<synchronous>, transform_indices = @transform_2, window_bounds = array<i64: 1, 128>}, {pipeline_mode = #tpu.pipeline_mode<synchronous>, transform_indices = @transform_3, window_bounds = array<i64: 128, 64>}, {pipeline_mode = #tpu.pipeline_mode<synchronous>, transform_indices = @transform_4, window_bounds = array<i64: 1, 64>}, {pipeline_mode = #tpu.pipeline_mode<synchronous>, transform_indices = @transform_5, window_bounds = array<i64: 64, 32>}, {pipeline_mode = #tpu.pipeline_mode<synchronous>, transform_indices = @transform_6, window_bounds = array<i64: 1, 32>}, {pipeline_mode = #tpu.pipeline_mode<synchronous>, transform_indices = @transform_7, window_bounds = array<i64: 32, 64>}, {pipeline_mode = #tpu.pipeline_mode<synchronous>, transform_indices = @transform_8, window_bounds = array<i64: 1, 64>}, {pipeline_mode = #tpu.pipeline_mode<synchronous>, transform_indices = @transform_9, window_bounds = array<i64: 64, 128>}, {pipeline_mode = #tpu.pipeline_mode<synchronous>, transform_indices = @transform_10, window_bounds = array<i64: 1, 128>}, {pipeline_mode = #tpu.pipeline_mode<synchronous>, transform_indices = @transform_11, window_bounds = array<i64: 128, 128>}, {pipeline_mode = #tpu.pipeline_mode<synchronous>, transform_indices = @transform_12, window_bounds = array<i64: 1, 128>}, {transform_indices = @transform_13, window_bounds = array<i64: 8, 128>}]} {
    %c0 = arith.constant 0 : index
    %c0_0 = arith.constant 0 : index
    %0 = vector.load %arg1[%c0, %c0_0] : memref<8x32xf32, #tpu.memory_space<vmem>>, vector<8x32xf32>
    %1 = arith.truncf %0 : vector<8x32xf32> to vector<8x32xbf16>
    %c0_1 = arith.constant 0 : index
    %c0_2 = arith.constant 0 : index
    %2 = vector.load %arg2[%c0_1, %c0_2] : memref<32x128xbf16, #tpu.memory_space<vmem>>, vector<32x128xbf16>
    %cst = arith.constant dense<0.000000e+00> : vector<8x128xf32>
    %3 = tpu.matmul %1, %2, %cst {dimension_numbers = #tpu.dot_dimension_numbers<[1], [0], [0], [1], [0, 0, 1, 1], [], []>} : vector<8x32xbf16>, vector<32x128xbf16>, vector<8x128xf32> -> vector<8x128xf32>
    %c0_3 = arith.constant 0 : index
    %c0_4 = arith.constant 0 : index
    %4 = vector.load %arg3[%c0_3, %c0_4] : memref<1x128xf32, #tpu.memory_space<vmem>>, vector<1x128xf32>
    %5 = vector.broadcast %4 : vector<1x128xf32> to vector<8x128xf32>
    %6 = arith.addf %3, %5 : vector<8x128xf32>
    %cst_5 = arith.constant 0.000000e+00 : f32
    %7 = vector.broadcast %cst_5 : f32 to vector<8x128xf32>
    %8 = arith.maximumf %6, %7 : vector<8x128xf32>
    %9 = arith.truncf %8 : vector<8x128xf32> to vector<8x128xbf16>
    %c0_6 = arith.constant 0 : index
    %c0_7 = arith.constant 0 : index
    %10 = vector.load %arg4[%c0_6, %c0_7] : memref<128x64xbf16, #tpu.memory_space<vmem>>, vector<128x64xbf16>
    %cst_8 = arith.constant dense<0.000000e+00> : vector<8x64xf32>
    %11 = tpu.matmul %9, %10, %cst_8 {dimension_numbers = #tpu.dot_dimension_numbers<[1], [0], [0], [1], [0, 0, 1, 1], [], []>} : vector<8x128xbf16>, vector<128x64xbf16>, vector<8x64xf32> -> vector<8x64xf32>
    %c0_9 = arith.constant 0 : index
    %c0_10 = arith.constant 0 : index
    %12 = vector.load %arg5[%c0_9, %c0_10] : memref<1x64xf32, #tpu.memory_space<vmem>>, vector<1x64xf32>
    %13 = vector.broadcast %12 : vector<1x64xf32> to vector<8x64xf32>
    %14 = arith.addf %11, %13 : vector<8x64xf32>
    %cst_11 = arith.constant 0.000000e+00 : f32
    %15 = vector.broadcast %cst_11 : f32 to vector<8x64xf32>
    %16 = arith.maximumf %14, %15 : vector<8x64xf32>
    %17 = arith.truncf %16 : vector<8x64xf32> to vector<8x64xbf16>
    %c0_12 = arith.constant 0 : index
    %c0_13 = arith.constant 0 : index
    %18 = vector.load %arg6[%c0_12, %c0_13] : memref<64x32xbf16, #tpu.memory_space<vmem>>, vector<64x32xbf16>
    %cst_14 = arith.constant dense<0.000000e+00> : vector<8x32xf32>
    %19 = tpu.matmul %17, %18, %cst_14 {dimension_numbers = #tpu.dot_dimension_numbers<[1], [0], [0], [1], [0, 0, 1, 1], [], []>} : vector<8x64xbf16>, vector<64x32xbf16>, vector<8x32xf32> -> vector<8x32xf32>
    %c0_15 = arith.constant 0 : index
    %c0_16 = arith.constant 0 : index
    %20 = vector.load %arg7[%c0_15, %c0_16] : memref<1x32xf32, #tpu.memory_space<vmem>>, vector<1x32xf32>
    %21 = vector.broadcast %20 : vector<1x32xf32> to vector<8x32xf32>
    %22 = arith.addf %19, %21 : vector<8x32xf32>
    %cst_17 = arith.constant 0.000000e+00 : f32
    %23 = vector.broadcast %cst_17 : f32 to vector<8x32xf32>
    %24 = arith.maximumf %22, %23 : vector<8x32xf32>
    %25 = arith.truncf %24 : vector<8x32xf32> to vector<8x32xbf16>
    %c0_18 = arith.constant 0 : index
    %c0_19 = arith.constant 0 : index
    %26 = vector.load %arg8[%c0_18, %c0_19] : memref<32x64xbf16, #tpu.memory_space<vmem>>, vector<32x64xbf16>
    %cst_20 = arith.constant dense<0.000000e+00> : vector<8x64xf32>
    %27 = tpu.matmul %25, %26, %cst_20 {dimension_numbers = #tpu.dot_dimension_numbers<[1], [0], [0], [1], [0, 0, 1, 1], [], []>} : vector<8x32xbf16>, vector<32x64xbf16>, vector<8x64xf32> -> vector<8x64xf32>
    %c0_21 = arith.constant 0 : index
    %c0_22 = arith.constant 0 : index
    %28 = vector.load %arg9[%c0_21, %c0_22] : memref<1x64xf32, #tpu.memory_space<vmem>>, vector<1x64xf32>
    %29 = vector.broadcast %28 : vector<1x64xf32> to vector<8x64xf32>
    %30 = arith.addf %27, %29 : vector<8x64xf32>
    %cst_23 = arith.constant 0.000000e+00 : f32
    %31 = vector.broadcast %cst_23 : f32 to vector<8x64xf32>
    %32 = arith.maximumf %30, %31 : vector<8x64xf32>
    %33 = arith.truncf %32 : vector<8x64xf32> to vector<8x64xbf16>
    %c0_24 = arith.constant 0 : index
    %c0_25 = arith.constant 0 : index
    %34 = vector.load %arg10[%c0_24, %c0_25] : memref<64x128xbf16, #tpu.memory_space<vmem>>, vector<64x128xbf16>
    %cst_26 = arith.constant dense<0.000000e+00> : vector<8x128xf32>
    %35 = tpu.matmul %33, %34, %cst_26 {dimension_numbers = #tpu.dot_dimension_numbers<[1], [0], [0], [1], [0, 0, 1, 1], [], []>} : vector<8x64xbf16>, vector<64x128xbf16>, vector<8x128xf32> -> vector<8x128xf32>
    %c0_27 = arith.constant 0 : index
    %c0_28 = arith.constant 0 : index
    %36 = vector.load %arg11[%c0_27, %c0_28] : memref<1x128xf32, #tpu.memory_space<vmem>>, vector<1x128xf32>
    %37 = vector.broadcast %36 : vector<1x128xf32> to vector<8x128xf32>
    %38 = arith.addf %35, %37 : vector<8x128xf32>
    %cst_29 = arith.constant 0.000000e+00 : f32
    %39 = vector.broadcast %cst_29 : f32 to vector<8x128xf32>
    %40 = arith.maximumf %38, %39 : vector<8x128xf32>
    %41 = arith.truncf %40 : vector<8x128xf32> to vector<8x128xbf16>
    %c0_30 = arith.constant 0 : index
    %c0_31 = arith.constant 0 : index
    %42 = vector.load %arg12[%c0_30, %c0_31] : memref<128x128xbf16, #tpu.memory_space<vmem>>, vector<128x128xbf16>
    %cst_32 = arith.constant dense<0.000000e+00> : vector<8x128xf32>
    %43 = tpu.matmul %41, %42, %cst_32 {dimension_numbers = #tpu.dot_dimension_numbers<[1], [0], [0], [1], [0, 0, 1, 1], [], []>} : vector<8x128xbf16>, vector<128x128xbf16>, vector<8x128xf32> -> vector<8x128xf32>
    %c0_33 = arith.constant 0 : index
    %c0_34 = arith.constant 0 : index
    %44 = vector.load %arg13[%c0_33, %c0_34] : memref<1x128xf32, #tpu.memory_space<vmem>>, vector<1x128xf32>
    %45 = vector.broadcast %44 : vector<1x128xf32> to vector<8x128xf32>
    %46 = arith.addf %43, %45 : vector<8x128xf32>
    %47 = arith.negf %46 : vector<8x128xf32>
    %48 = math.exp %47 : vector<8x128xf32>
    %cst_35 = arith.constant 1.000000e+00 : f32
    %49 = vector.broadcast %cst_35 : f32 to vector<8x128xf32>
    %50 = arith.addf %49, %48 : vector<8x128xf32>
    %51 = arith.divf %49, %50 : vector<8x128xf32>
    %c0_36 = arith.constant 0 : index
    %c0_37 = arith.constant 0 : index
    %52 = vector.load %arg14[%c0_36, %c0_37] : memref<8x128xf32, #tpu.memory_space<vmem>>, vector<8x128xf32>
    tpu.vector_store %arg14[%c0_36, %c0_37], %51 {strides = array<i32>} : memref<8x128xf32, #tpu.memory_space<vmem>>, vector<8x128xf32>,
    return
  }
  func.func @transform_0(%arg0: i32) -> (i32, i32) {
    %c0_i32 = arith.constant 0 : i32
    %c0_i32_0 = arith.constant 0 : i32
    return %arg0, %c0_i32 : i32, i32
  }
  func.func @transform_1(%arg0: i32) -> (i32, i32) {
    %c0_i32 = arith.constant 0 : i32
    %c0_i32_0 = arith.constant 0 : i32
    %c0_i32_1 = arith.constant 0 : i32
    return %c0_i32, %c0_i32_0 : i32, i32
  }
  func.func @transform_2(%arg0: i32) -> (i32, i32) {
    %c0_i32 = arith.constant 0 : i32
    %c0_i32_0 = arith.constant 0 : i32
    %c0_i32_1 = arith.constant 0 : i32
    return %c0_i32, %c0_i32_0 : i32, i32
  }
  func.func @transform_3(%arg0: i32) -> (i32, i32) {
    %c0_i32 = arith.constant 0 : i32
    %c0_i32_0 = arith.constant 0 : i32
    %c0_i32_1 = arith.constant 0 : i32
    return %c0_i32, %c0_i32_0 : i32, i32
  }
  func.func @transform_4(%arg0: i32) -> (i32, i32) {
    %c0_i32 = arith.constant 0 : i32
    %c0_i32_0 = arith.constant 0 : i32
    %c0_i32_1 = arith.constant 0 : i32
    return %c0_i32, %c0_i32_0 : i32, i32
  }
  func.func @transform_5(%arg0: i32) -> (i32, i32) {
    %c0_i32 = arith.constant 0 : i32
    %c0_i32_0 = arith.constant 0 : i32
    %c0_i32_1 = arith.constant 0 : i32
    return %c0_i32, %c0_i32_0 : i32, i32
  }
  func.func @transform_6(%arg0: i32) -> (i32, i32) {
    %c0_i32 = arith.constant 0 : i32
    %c0_i32_0 = arith.constant 0 : i32
    %c0_i32_1 = arith.constant 0 : i32
    return %c0_i32, %c0_i32_0 : i32, i32
  }
  func.func @transform_7(%arg0: i32) -> (i32, i32) {
    %c0_i32 = arith.constant 0 : i32
    %c0_i32_0 = arith.constant 0 : i32
    %c0_i32_1 = arith.constant 0 : i32
    return %c0_i32, %c0_i32_0 : i32, i32
  }
  func.func @transform_8(%arg0: i32) -> (i32, i32) {
    %c0_i32 = arith.constant 0 : i32
    %c0_i32_0 = arith.constant 0 : i32
    %c0_i32_1 = arith.constant 0 : i32
    return %c0_i32, %c0_i32_0 : i32, i32
  }
  func.func @transform_9(%arg0: i32) -> (i32, i32) {
    %c0_i32 = arith.constant 0 : i32
    %c0_i32_0 = arith.constant 0 : i32
    %c0_i32_1 = arith.constant 0 : i32
    return %c0_i32, %c0_i32_0 : i32, i32
  }
  func.func @transform_10(%arg0: i32) -> (i32, i32) {
    %c0_i32 = arith.constant 0 : i32
    %c0_i32_0 = arith.constant 0 : i32
    %c0_i32_1 = arith.constant 0 : i32
    return %c0_i32, %c0_i32_0 : i32, i32
  }
  func.func @transform_11(%arg0: i32) -> (i32, i32) {
    %c0_i32 = arith.constant 0 : i32
    %c0_i32_0 = arith.constant 0 : i32
    %c0_i32_1 = arith.constant 0 : i32
    return %c0_i32, %c0_i32_0 : i32, i32
  }
  func.func @transform_12(%arg0: i32) -> (i32, i32) {
    %c0_i32 = arith.constant 0 : i32
    %c0_i32_0 = arith.constant 0 : i32
    %c0_i32_1 = arith.constant 0 : i32
    return %c0_i32, %c0_i32_0 : i32, i32
  }
  func.func @transform_13(%arg0: i32) -> (i32, i32) {
    %c0_i32 = arith.constant 0 : i32
    %c0_i32_0 = arith.constant 0 : i32
    return %arg0, %c0_i32 : i32, i32
  }
}

</mosaic_0001>

<llo_original>
// kernel: tpu_custom_call.1
$region0: #{tpu_custom_call.1}
  #allocation0 [shape = 'u32[]', space=smem, size = 0x4, offset = 0x4, fixed_abs, tag = 'smem constant byte address 0x4 - core index']
  #allocation1 [shape = 'u32[144,128]{1,0:T(1,128)}', space=vmem, size = 0x12000, scoped, tag = 'internal scratch']
  %s0 = inlined_call_operand.hbm [shape: f32[8,32], index: 0, kind: input, shape index: {}]
  %s1 = inlined_call_operand.vmem [shape: bf16[32,128], index: 1, kind: input, shape index: {}]
  %s2 = inlined_call_operand.vmem [shape: f32[1,128], index: 2, kind: input, shape index: {}]
  %s3 = inlined_call_operand.vmem [shape: bf16[128,64], index: 3, kind: input, shape index: {}]
  %s4 = inlined_call_operand.vmem [shape: f32[1,64], index: 4, kind: input, shape index: {}]
  %s5 = inlined_call_operand.vmem [shape: bf16[64,32], index: 5, kind: input, shape index: {}]
  %s6 = inlined_call_operand.vmem [shape: f32[1,32], index: 6, kind: input, shape index: {}]
  %s7 = inlined_call_operand.hbm [shape: bf16[32,64], index: 7, kind: input, shape index: {}]
  %s8 = inlined_call_operand.vmem [shape: f32[1,64], index: 8, kind: input, shape index: {}]
  %s9 = inlined_call_operand.vmem [shape: bf16[64,128], index: 9, kind: input, shape index: {}]
  %s10 = inlined_call_operand.vmem [shape: f32[1,128], index: 10, kind: input, shape index: {}]
  %s11 = inlined_call_operand.vmem [shape: bf16[128,128], index: 11, kind: input, shape index: {}]
  %s12 = inlined_call_operand.vmem [shape: f32[1,128], index: 12, kind: input, shape index: {}]
  %s13 = inlined_call_operand.hbm [shape: f32[8,128], index: 13, kind: output, shape index: {}]
  %s14 = sld [smem:[#allocation0]]
  $region70: #{tpu_custom_call.1} parent=0
    _
  %s16 = ssub.s32 1, %s14
  %s17 = scalar_select 0, %s16, %s14
  $region1: #{tpu_custom_call.1} parent=0
    #allocation2 [shape = 'u8[4096]{0}', space=vmem, size = 0x1000, scoped, tag = 'input window, operand 0, single buffered']
    #allocation3 [shape = 's32[1]{0}', space=sflag, size = 0x4, scoped, tag = 'scoped memory for tpu_custom_call.1']
    #allocation4 [shape = 's32[1]{0}', space=sflag, size = 0x4, scoped, tag = 'scoped memory for tpu_custom_call.1']
    #allocation5 [shape = 'u8[8192]{0}', space=vmem, size = 0x2000, scoped, tag = 'input window, operand 7, single buffered']
    #allocation6 [shape = 's32[1]{0}', space=sflag, size = 0x4, scoped, tag = 'scoped memory for tpu_custom_call.1']
    #allocation7 [shape = 'u8[4096]{0}', space=vmem, size = 0x1000, scoped, tag = 'output window, operand 0, single buffered']
    %18 = vsyncpa [#allocation3], 0
    %19 = vsyncpa [#allocation6], 0
    %20 = vsyncpa [#allocation4], 0
    // Predicated region
    $region2: #{tpu_custom_call.1} parent=1 // pred_check
      _
    $region3: #{tpu_custom_call.1} parent=1 // pred_check_branch
      %22 = sbr.rel (0) target = $region5
    $region4: #{tpu_custom_call.1} parent=1 // pred_region
      %s24 = ssub.s32 128, 128
      %25 = vsyncadd [#allocation3], %s24
      %s27 = sshll.u32 [#allocation2], 4
      %s28 = int_to_ptr.vmem [resolvable:$true] %s27
      %30 = dma.hbm_to_vmem [thread:$0]  %s0, 128, %s28, [#allocation3]
    $region5: #{tpu_custom_call.1} parent=1 // pred_fallthru
      _
    // Predicated region
    $region6: #{tpu_custom_call.1} parent=1 // pred_check
      _
    $region7: #{tpu_custom_call.1} parent=1 // pred_check_branch
      %32 = sbr.rel (0) target = $region9
    $region8: #{tpu_custom_call.1} parent=1 // pred_region
      _
    $region9: #{tpu_custom_call.1} parent=1 // pred_fallthru
      _
    // Predicated region
    $region10: #{tpu_custom_call.1} parent=1 // pred_check
      _
    $region11: #{tpu_custom_call.1} parent=1 // pred_check_branch
      %34 = sbr.rel (0) target = $region13
    $region12: #{tpu_custom_call.1} parent=1 // pred_region
      _
    $region13: #{tpu_custom_call.1} parent=1 // pred_fallthru
      _
    // Predicated region
    $region14: #{tpu_custom_call.1} parent=1 // pred_check
      _
    $region15: #{tpu_custom_call.1} parent=1 // pred_check_branch
      %36 = sbr.rel (0) target = $region17
    $region16: #{tpu_custom_call.1} parent=1 // pred_region
      _
    $region17: #{tpu_custom_call.1} parent=1 // pred_fallthru
      _
    // Predicated region
    $region18: #{tpu_custom_call.1} parent=1 // pred_check
      _
    $region19: #{tpu_custom_call.1} parent=1 // pred_check_branch
      %38 = sbr.rel (0) target = $region21
    $region20: #{tpu_custom_call.1} parent=1 // pred_region
      _
    $region21: #{tpu_custom_call.1} parent=1 // pred_fallthru
      _
    // Predicated region
    $region22: #{tpu_custom_call.1} parent=1 // pred_check
      _
    $region23: #{tpu_custom_call.1} parent=1 // pred_check_branch
      %40 = sbr.rel (0) target = $region25
    $region24: #{tpu_custom_call.1} parent=1 // pred_region
      _
    $region25: #{tpu_custom_call.1} parent=1 // pred_fallthru
      _
    // Predicated region
    $region26: #{tpu_custom_call.1} parent=1 // pred_check
      _
    $region27: #{tpu_custom_call.1} parent=1 // pred_check_branch
      %42 = sbr.rel (0) target = $region29
    $region28: #{tpu_custom_call.1} parent=1 // pred_region
      _
    $region29: #{tpu_custom_call.1} parent=1 // pred_fallthru
      _
    // Predicated region
    $region30: #{tpu_custom_call.1} parent=1 // pred_check
      _
    $region31: #{tpu_custom_call.1} parent=1 // pred_check_branch
      %44 = sbr.rel (0) target = $region33
    $region32: #{tpu_custom_call.1} parent=1 // pred_region
      %s46 = ssub.s32 256, 256
      %47 = vsyncadd [#allocation6], %s46
      %s48 = sshll.u32 [#allocation5], 4
      %s49 = int_to_ptr.vmem [resolvable:$true] %s48
      %54 = dma.hbm_to_vmem [thread:$0]  %s7, 256, %s49, [#allocation6], 64, 64, 4
    $region33: #{tpu_custom_call.1} parent=1 // pred_fallthru
      _
    // Predicated region
    $region34: #{tpu_custom_call.1} parent=1 // pred_check
      _
    $region35: #{tpu_custom_call.1} parent=1 // pred_check_branch
      %56 = sbr.rel (0) target = $region37
    $region36: #{tpu_custom_call.1} parent=1 // pred_region
      _
    $region37: #{tpu_custom_call.1} parent=1 // pred_fallthru
      _
    // Predicated region
    $region38: #{tpu_custom_call.1} parent=1 // pred_check
      _
    $region39: #{tpu_custom_call.1} parent=1 // pred_check_branch
      %58 = sbr.rel (0) target = $region41
    $region40: #{tpu_custom_call.1} parent=1 // pred_region
      _
    $region41: #{tpu_custom_call.1} parent=1 // pred_fallthru
      _
    // Predicated region
    $region42: #{tpu_custom_call.1} parent=1 // pred_check
      _
    $region43: #{tpu_custom_call.1} parent=1 // pred_check_branch
      %60 = sbr.rel (0) target = $region45
    $region44: #{tpu_custom_call.1} parent=1 // pred_region
      _
    $region45: #{tpu_custom_call.1} parent=1 // pred_fallthru
      _
    // Predicated region
    $region46: #{tpu_custom_call.1} parent=1 // pred_check
      _
    $region47: #{tpu_custom_call.1} parent=1 // pred_check_branch
      %62 = sbr.rel (0) target = $region49
    $region48: #{tpu_custom_call.1} parent=1 // pred_region
      _
    $region49: #{tpu_custom_call.1} parent=1 // pred_fallthru
      _
    // Predicated region
    $region50: #{tpu_custom_call.1} parent=1 // pred_check
      _
    $region51: #{tpu_custom_call.1} parent=1 // pred_check_branch
      %64 = sbr.rel (0) target = $region53
    $region52: #{tpu_custom_call.1} parent=1 // pred_region
      _
    $region53: #{tpu_custom_call.1} parent=1 // pred_fallthru
      _
    // Predicated region
    $region54: #{tpu_custom_call.1} parent=1 // pred_check
      _
    $region55: #{tpu_custom_call.1} parent=1 // pred_check_branch
      %66 = sbr.rel (0) target = $region57
    $region56: #{tpu_custom_call.1} parent=1 // pred_region
      %67 = dma.done [#allocation3], 128
    $region57: #{tpu_custom_call.1} parent=1 // pred_fallthru
      _
    // Predicated region
    $region58: #{tpu_custom_call.1} parent=1 // pred_check
      _
    $region59: #{tpu_custom_call.1} parent=1 // pred_check_branch
      %69 = sbr.rel (0) target = $region61
    $region60: #{tpu_custom_call.1} parent=1 // pred_region
      %70 = dma.done [#allocation6], 256
    $region61: #{tpu_custom_call.1} parent=1 // pred_fallthru
      _
    %v72 = vld [vmem:[#allocation2] sm:$0xff]
    %v73 = vpack.c.bf16 %v72, %v72
    %v74 = vld [vmem:[%s1] sm:$0xf]
    %v75 = vld [vmem:[%s1 + $0x4] sm:$0xf]
    %v76 = vld [vmem:[%s1 + $0x8] sm:$0xf]
    %v77 = vld [vmem:[%s1 + $0xc] sm:$0xf]
    %v78 = vld [vmem:[%s2] sm:$0x1]
    %v80 = vlaneseq
    %v81 = vshrl.u32 %v80, 7
    %v82 = vsub.s32 0, %v81
    %v83 = vrot.slane %v78, %v82
    %v89 = vunpack.c.l.b16 %v74
    %v90 = vunpack.c.l.b16 %v75
    %v91 = vunpack.c.l.b16 %v76
    %v92 = vunpack.c.l.b16 %v77
    %v93 = vpack.c.b16 %v90, %v89
    %v94 = vpack.c.b16 %v92, %v91
    %vm97 = vcmask 261120
    %v99 = vsel %vm97, %v73, 0
    %101 = vmatprep.subr.bf16.mxu0 0
    %102 = vmatpush1.bf16.msra.mxu0 0
    %103 = vmatprep.subr.bf16.mxu0 0
    %104 = vmatpush1.bf16.msra.mxu0 0
    %105 = vmatprep.subr.bf16.mxu0 0
    %106 = vmatpush1.bf16.msra.mxu0 0
    %107 = vmatprep.subr.bf16.mxu0 0
    %108 = vmatpush1.bf16.msra.mxu0 0
    %109 = vmatprep.subr.bf16.mxu0 0
    %110 = vmatpush1.bf16.msra.mxu0 0
    %111 = vmatprep.subr.bf16.mxu0 0
    %112 = vmatpush1.bf16.msra.mxu0 0
    %113 = vmatprep.subr.bf16.mxu0 0
    %114 = vmatpush1.bf16.msra.mxu0 %v94
    %115 = vmatprep.subr.bf16.mxu0 0
    %116 = vmatpush1.bf16.msra.mxu0 %v93
    %117 = vmatprep.subr.bf16.mxu0 0
    %118 = vmatpush2.bf16.msra.mxu0 0
    %119 = vmatprep.subr.bf16.mxu0 0
    %120 = vmatpush2.bf16.msra.mxu0 0
    %121 = vmatprep.subr.bf16.mxu0 0
    %122 = vmatpush2.bf16.msra.mxu0 0
    %123 = vmatprep.subr.bf16.mxu0 0
    %124 = vmatpush2.bf16.msra.mxu0 0
    %125 = vmatprep.subr.bf16.mxu0 0
    %126 = vmatpush2.bf16.msra.mxu0 0
    %127 = vmatprep.subr.bf16.mxu0 0
    %128 = vmatpush2.bf16.msra.mxu0 0
    %129 = vmatprep.subr.bf16.mxu0 0
    %130 = vmatpush2.bf16.msra.mxu0 0
    %131 = vmatprep.subr.bf16.mxu0 0
    %132 = vmatpush2.bf16.msra.mxu0 0
    %133 = vmatprep.mubr.bf16.mxu0 0
    %134 = vmatmul.mubr.bf16.gmra.mxu0 %v99
    %v135 = vpop.f32.mrf.mxu0
    %v136 = vadd.f32 %v83, %v135
    %v137 = vpop.f32.mrf.mxu0
    %v138 = vpop.f32.mrf.mxu0
    %v139 = vpop.f32.mrf.mxu0
    %140 = vdwg.mxu0
    %v141 = vmax.f32 %v136, 0.0
    %v142 = vpack.c.bf16 %v141, %v141
    %v143 = vld [vmem:[%s3] sm:$0xf]
    %v144 = vld [vmem:[%s3 + $0x4] sm:$0xf]
    %v145 = vld [vmem:[%s3 + $0x8] sm:$0xf]
    %v146 = vld [vmem:[%s3 + $0xc] sm:$0xf]
    %v147 = vld [vmem:[%s3 + $0x10] sm:$0xf]
    %v148 = vld [vmem:[%s3 + $0x14] sm:$0xf]
    %v149 = vld [vmem:[%s3 + $0x18] sm:$0xf]
    %v150 = vld [vmem:[%s3 + $0x1c] sm:$0xf]
    %v151 = vld [vmem:[%s3 + $0x20] sm:$0xf]
    %v152 = vld [vmem:[%s3 + $0x24] sm:$0xf]
    %v153 = vld [vmem:[%s3 + $0x28] sm:$0xf]
    %v154 = vld [vmem:[%s3 + $0x2c] sm:$0xf]
    %v155 = vld [vmem:[%s3 + $0x30] sm:$0xf]
    %v156 = vld [vmem:[%s3 + $0x34] sm:$0xf]
    %v157 = vld [vmem:[%s3 + $0x38] sm:$0xf]
    %v158 = vld [vmem:[%s3 + $0x3c] sm:$0xf]
    %v159 = vld [vmem:[%s4] sm:$0x1]
    %v161 = vlaneseq
    %v162 = vshrl.u32 %v161, 7
    %v163 = vsub.s32 0, %v162
    %v164 = vrot.slane %v159, %v163
    %v182 = vunpack.c.l.b16 %v143
    %v183 = vunpack.c.l.b16 %v144
    %v184 = vunpack.c.l.b16 %v145
    %v185 = vunpack.c.l.b16 %v146
    %v186 = vunpack.c.l.b16 %v147
    %v187 = vunpack.c.l.b16 %v148
    %v188 = vunpack.c.l.b16 %v149
    %v189 = vunpack.c.l.b16 %v150
    %v190 = vunpack.c.l.b16 %v151
    %v191 = vunpack.c.l.b16 %v152
    %v192 = vunpack.c.l.b16 %v153
    %v193 = vunpack.c.l.b16 %v154
    %v194 = vunpack.c.l.b16 %v155
    %v195 = vunpack.c.l.b16 %v156
    %v196 = vunpack.c.l.b16 %v157
    %v197 = vunpack.c.l.b16 %v158
    %v198 = vpack.c.b16 %v183, %v182
    %v199 = vpack.c.b16 %v185, %v184
    %v200 = vpack.c.b16 %v187, %v186
    %v201 = vpack.c.b16 %v189, %v188
    %v202 = vpack.c.b16 %v191, %v190
    %v203 = vpack.c.b16 %v193, %v192
    %v204 = vpack.c.b16 %v195, %v194
    %v205 = vpack.c.b16 %v197, %v196
    %214 = vmatprep.subr.bf16.mxu0 0
    %215 = vmatpush1.bf16.msra.mxu0 %v205
    %216 = vmatprep.subr.bf16.mxu0 0
    %217 = vmatpush1.bf16.msra.mxu0 %v204
    %218 = vmatprep.subr.bf16.mxu0 0
    %219 = vmatpush1.bf16.msra.mxu0 %v203
    %220 = vmatprep.subr.bf16.mxu0 0
    %221 = vmatpush1.bf16.msra.mxu0 %v202
    %222 = vmatprep.subr.bf16.mxu0 0
    %223 = vmatpush1.bf16.msra.mxu0 %v201
    %224 = vmatprep.subr.bf16.mxu0 0
    %225 = vmatpush1.bf16.msra.mxu0 %v200
    %226 = vmatprep.subr.bf16.mxu0 0
    %227 = vmatpush1.bf16.msra.mxu0 %v199
    %228 = vmatprep.subr.bf16.mxu0 0
    %229 = vmatpush1.bf16.msra.mxu0 %v198
    %230 = vmatprep.subr.bf16.mxu0 0
    %231 = vmatpush2.bf16.msra.mxu0 0
    %232 = vmatprep.subr.bf16.mxu0 0
    %233 = vmatpush2.bf16.msra.mxu0 0
    %234 = vmatprep.subr.bf16.mxu0 0
    %235 = vmatpush2.bf16.msra.mxu0 0
    %236 = vmatprep.subr.bf16.mxu0 0
    %237 = vmatpush2.bf16.msra.mxu0 0
    %238 = vmatprep.subr.bf16.mxu0 0
    %239 = vmatpush2.bf16.msra.mxu0 0
    %240 = vmatprep.subr.bf16.mxu0 0
    %241 = vmatpush2.bf16.msra.mxu0 0
    %242 = vmatprep.subr.bf16.mxu0 0
    %243 = vmatpush2.bf16.msra.mxu0 0
    %244 = vmatprep.subr.bf16.mxu0 0
    %245 = vmatpush2.bf16.msra.mxu0 0
    %246 = vmatprep.mubr.bf16.mxu0 0
    %247 = vmatmul.mubr.bf16.gmra.mxu0 %v142
    %v248 = vpop.f32.mrf.mxu0
    %v249 = vadd.f32 %v164, %v248
    %v250 = vpop.f32.mrf.mxu0
    %v251 = vpop.f32.mrf.mxu0
    %v252 = vpop.f32.mrf.mxu0
    %253 = vdwg.mxu0
    %v254 = vmax.f32 %v249, 0.0
    %v255 = vpack.c.bf16 %v254, %v254
    %v256 = vld [vmem:[%s5] sm:$0xf]
    %v257 = vld [vmem:[%s5 + $0x4] sm:$0xf]
    %v258 = vld [vmem:[%s5 + $0x8] sm:$0xf]
    %v259 = vld [vmem:[%s5 + $0xc] sm:$0xf]
    %v260 = vld [vmem:[%s5 + $0x10] sm:$0xf]
    %v261 = vld [vmem:[%s5 + $0x14] sm:$0xf]
    %v262 = vld [vmem:[%s5 + $0x18] sm:$0xf]
    %v263 = vld [vmem:[%s5 + $0x1c] sm:$0xf]
    %v264 = vld [vmem:[%s6] sm:$0x1]
    %v266 = vlaneseq
    %v267 = vshrl.u32 %v266, 7
    %v268 = vsub.s32 0, %v267
    %v269 = vrot.slane %v264, %v268
    %v279 = vunpack.c.l.b16 %v256
    %v280 = vunpack.c.l.b16 %v257
    %v281 = vunpack.c.l.b16 %v258
    %v282 = vunpack.c.l.b16 %v259
    %v283 = vunpack.c.l.b16 %v260
    %v284 = vunpack.c.l.b16 %v261
    %v285 = vunpack.c.l.b16 %v262
    %v286 = vunpack.c.l.b16 %v263
    %v287 = vpack.c.b16 %v280, %v279
    %v288 = vpack.c.b16 %v282, %v281
    %v289 = vpack.c.b16 %v284, %v283
    %v290 = vpack.c.b16 %v286, %v285
    %vm295 = vcmask 523264
    %v297 = vsel %vm295, %v255, 0
    %299 = vmatprep.subr.bf16.mxu0 0
    %300 = vmatpush1.bf16.msra.mxu0 0
    %301 = vmatprep.subr.bf16.mxu0 0
    %302 = vmatpush1.bf16.msra.mxu0 0
    %303 = vmatprep.subr.bf16.mxu0 0
    %304 = vmatpush1.bf16.msra.mxu0 0
    %305 = vmatprep.subr.bf16.mxu0 0
    %306 = vmatpush1.bf16.msra.mxu0 0
    %307 = vmatprep.subr.bf16.mxu0 0
    %308 = vmatpush1.bf16.msra.mxu0 %v290
    %309 = vmatprep.subr.bf16.mxu0 0
    %310 = vmatpush1.bf16.msra.mxu0 %v289
    %311 = vmatprep.subr.bf16.mxu0 0
    %312 = vmatpush1.bf16.msra.mxu0 %v288
    %313 = vmatprep.subr.bf16.mxu0 0
    %314 = vmatpush1.bf16.msra.mxu0 %v287
    %315 = vmatprep.subr.bf16.mxu0 0
    %316 = vmatpush2.bf16.msra.mxu0 0
    %317 = vmatprep.subr.bf16.mxu0 0
    %318 = vmatpush2.bf16.msra.mxu0 0
    %319 = vmatprep.subr.bf16.mxu0 0
    %320 = vmatpush2.bf16.msra.mxu0 0
    %321 = vmatprep.subr.bf16.mxu0 0
    %322 = vmatpush2.bf16.msra.mxu0 0
    %323 = vmatprep.subr.bf16.mxu0 0
    %324 = vmatpush2.bf16.msra.mxu0 0
    %325 = vmatprep.subr.bf16.mxu0 0
    %326 = vmatpush2.bf16.msra.mxu0 0
    %327 = vmatprep.subr.bf16.mxu0 0
    %328 = vmatpush2.bf16.msra.mxu0 0
    %329 = vmatprep.subr.bf16.mxu0 0
    %330 = vmatpush2.bf16.msra.mxu0 0
    %331 = vmatprep.mubr.bf16.mxu0 0
    %332 = vmatmul.mubr.bf16.gmra.mxu0 %v297
    %v333 = vpop.f32.mrf.mxu0
    %v334 = vadd.f32 %v269, %v333
    %v335 = vpop.f32.mrf.mxu0
    %v336 = vpop.f32.mrf.mxu0
    %v337 = vpop.f32.mrf.mxu0
    %338 = vdwg.mxu0
    %v339 = vmax.f32 %v334, 0.0
    %v340 = vpack.c.bf16 %v339, %v339
    %v341 = vld [vmem:[#allocation5] sm:$0xf]
    %v342 = vld [vmem:[#allocation5 + $0x4] sm:$0xf]
    %v343 = vld [vmem:[#allocation5 + $0x8] sm:$0xf]
    %v344 = vld [vmem:[#allocation5 + $0xc] sm:$0xf]
    %v345 = vld [vmem:[%s8] sm:$0x1]
    %v347 = vlaneseq
    %v348 = vshrl.u32 %v347, 7
    %v349 = vsub.s32 0, %v348
    %v350 = vrot.slane %v345, %v349
    %v356 = vunpack.c.l.b16 %v341
    %v357 = vunpack.c.l.b16 %v342
    %v358 = vunpack.c.l.b16 %v343
    %v359 = vunpack.c.l.b16 %v344
    %v360 = vpack.c.b16 %v357, %v356
    %v361 = vpack.c.b16 %v359, %v358
    %v365 = vsel %vm97, %v340, 0
    %367 = vmatprep.subr.bf16.mxu0 0
    %368 = vmatpush1.bf16.msra.mxu0 0
    %369 = vmatprep.subr.bf16.mxu0 0
    %370 = vmatpush1.bf16.msra.mxu0 0
    %371 = vmatprep.subr.bf16.mxu0 0
    %372 = vmatpush1.bf16.msra.mxu0 0
    %373 = vmatprep.subr.bf16.mxu0 0
    %374 = vmatpush1.bf16.msra.mxu0 0
    %375 = vmatprep.subr.bf16.mxu0 0
    %376 = vmatpush1.bf16.msra.mxu0 0
    %377 = vmatprep.subr.bf16.mxu0 0
    %378 = vmatpush1.bf16.msra.mxu0 0
    %379 = vmatprep.subr.bf16.mxu0 0
    %380 = vmatpush1.bf16.msra.mxu0 %v361
    %381 = vmatprep.subr.bf16.mxu0 0
    %382 = vmatpush1.bf16.msra.mxu0 %v360
    %383 = vmatprep.subr.bf16.mxu0 0
    %384 = vmatpush2.bf16.msra.mxu0 0
    %385 = vmatprep.subr.bf16.mxu0 0
    %386 = vmatpush2.bf16.msra.mxu0 0
    %387 = vmatprep.subr.bf16.mxu0 0
    %388 = vmatpush2.bf16.msra.mxu0 0
    %389 = vmatprep.subr.bf16.mxu0 0
    %390 = vmatpush2.bf16.msra.mxu0 0
    %391 = vmatprep.subr.bf16.mxu0 0
    %392 = vmatpush2.bf16.msra.mxu0 0
    %393 = vmatprep.subr.bf16.mxu0 0
    %394 = vmatpush2.bf16.msra.mxu0 0
    %395 = vmatprep.subr.bf16.mxu0 0
    %396 = vmatpush2.bf16.msra.mxu0 0
    %397 = vmatprep.subr.bf16.mxu0 0
    %398 = vmatpush2.bf16.msra.mxu0 0
    %399 = vmatprep.mubr.bf16.mxu0 0
    %400 = vmatmul.mubr.bf16.gmra.mxu0 %v365
    %v401 = vpop.f32.mrf.mxu0
    %v402 = vadd.f32 %v350, %v401
    %v403 = vpop.f32.mrf.mxu0
    %v404 = vpop.f32.mrf.mxu0
    %v405 = vpop.f32.mrf.mxu0
    %406 = vdwg.mxu0
    %v407 = vmax.f32 %v402, 0.0
    %v408 = vpack.c.bf16 %v407, %v407
    %v409 = vld [vmem:[%s9] sm:$0xf]
    %v410 = vld [vmem:[%s9 + $0x4] sm:$0xf]
    %v411 = vld [vmem:[%s9 + $0x8] sm:$0xf]
    %v412 = vld [vmem:[%s9 + $0xc] sm:$0xf]
    %v413 = vld [vmem:[%s9 + $0x10] sm:$0xf]
    %v414 = vld [vmem:[%s9 + $0x14] sm:$0xf]
    %v415 = vld [vmem:[%s9 + $0x18] sm:$0xf]
    %v416 = vld [vmem:[%s9 + $0x1c] sm:$0xf]
    %v417 = vld [vmem:[%s10] sm:$0x1]
    %v419 = vlaneseq
    %v420 = vshrl.u32 %v419, 7
    %v421 = vsub.s32 0, %v420
    %v422 = vrot.slane %v417, %v421
    %v432 = vunpack.c.l.b16 %v409
    %v433 = vunpack.c.l.b16 %v410
    %v434 = vunpack.c.l.b16 %v411
    %v435 = vunpack.c.l.b16 %v412
    %v436 = vunpack.c.l.b16 %v413
    %v437 = vunpack.c.l.b16 %v414
    %v438 = vunpack.c.l.b16 %v415
    %v439 = vunpack.c.l.b16 %v416
    %v440 = vpack.c.b16 %v433, %v432
    %v441 = vpack.c.b16 %v435, %v434
    %v442 = vpack.c.b16 %v437, %v436
    %v443 = vpack.c.b16 %v439, %v438
    %v449 = vsel %vm295, %v408, 0
    %451 = vmatprep.subr.bf16.mxu0 0
    %452 = vmatpush1.bf16.msra.mxu0 0
    %453 = vmatprep.subr.bf16.mxu0 0
    %454 = vmatpush1.bf16.msra.mxu0 0
    %455 = vmatprep.subr.bf16.mxu0 0
    %456 = vmatpush1.bf16.msra.mxu0 0
    %457 = vmatprep.subr.bf16.mxu0 0
    %458 = vmatpush1.bf16.msra.mxu0 0
    %459 = vmatprep.subr.bf16.mxu0 0
    %460 = vmatpush1.bf16.msra.mxu0 %v443
    %461 = vmatprep.subr.bf16.mxu0 0
    %462 = vmatpush1.bf16.msra.mxu0 %v442
    %463 = vmatprep.subr.bf16.mxu0 0
    %464 = vmatpush1.bf16.msra.mxu0 %v441
    %465 = vmatprep.subr.bf16.mxu0 0
    %466 = vmatpush1.bf16.msra.mxu0 %v440
    %467 = vmatprep.subr.bf16.mxu0 0
    %468 = vmatpush2.bf16.msra.mxu0 0
    %469 = vmatprep.subr.bf16.mxu0 0
    %470 = vmatpush2.bf16.msra.mxu0 0
    %471 = vmatprep.subr.bf16.mxu0 0
    %472 = vmatpush2.bf16.msra.mxu0 0
    %473 = vmatprep.subr.bf16.mxu0 0
    %474 = vmatpush2.bf16.msra.mxu0 0
    %475 = vmatprep.subr.bf16.mxu0 0
    %476 = vmatpush2.bf16.msra.mxu0 0
    %477 = vmatprep.subr.bf16.mxu0 0
    %478 = vmatpush2.bf16.msra.mxu0 0
    %479 = vmatprep.subr.bf16.mxu0 0
    %480 = vmatpush2.bf16.msra.mxu0 0
    %481 = vmatprep.subr.bf16.mxu0 0
    %482 = vmatpush2.bf16.msra.mxu0 0
    %483 = vmatprep.mubr.bf16.mxu0 0
    %484 = vmatmul.mubr.bf16.gmra.mxu0 %v449
    %v485 = vpop.f32.mrf.mxu0
    %v486 = vadd.f32 %v422, %v485
    %v487 = vpop.f32.mrf.mxu0
    %v488 = vpop.f32.mrf.mxu0
    %v489 = vpop.f32.mrf.mxu0
    %490 = vdwg.mxu0
    %v491 = vmax.f32 %v486, 0.0
    %v492 = vpack.c.bf16 %v491, %v491
    %v493 = vld [vmem:[%s11] sm:$0xf]
    %v494 = vld [vmem:[%s11 + $0x4] sm:$0xf]
    %v495 = vld [vmem:[%s11 + $0x8] sm:$0xf]
    %v496 = vld [vmem:[%s11 + $0xc] sm:$0xf]
    %v497 = vld [vmem:[%s11 + $0x10] sm:$0xf]
    %v498 = vld [vmem:[%s11 + $0x14] sm:$0xf]
    %v499 = vld [vmem:[%s11 + $0x18] sm:$0xf]
    %v500 = vld [vmem:[%s11 + $0x1c] sm:$0xf]
    %v501 = vld [vmem:[%s11 + $0x20] sm:$0xf]
    %v502 = vld [vmem:[%s11 + $0x24] sm:$0xf]
    %v503 = vld [vmem:[%s11 + $0x28] sm:$0xf]
    %v504 = vld [vmem:[%s11 + $0x2c] sm:$0xf]
    %v505 = vld [vmem:[%s11 + $0x30] sm:$0xf]
    %v506 = vld [vmem:[%s11 + $0x34] sm:$0xf]
    %v507 = vld [vmem:[%s11 + $0x38] sm:$0xf]
    %v508 = vld [vmem:[%s11 + $0x3c] sm:$0xf]
    %v509 = vld [vmem:[%s12] sm:$0x1]
    %v511 = vlaneseq
    %v512 = vshrl.u32 %v511, 7
    %v513 = vsub.s32 0, %v512
    %v514 = vrot.slane %v509, %v513
    %v532 = vunpack.c.l.b16 %v493
    %v533 = vunpack.c.l.b16 %v494
    %v534 = vunpack.c.l.b16 %v495
    %v535 = vunpack.c.l.b16 %v496
    %v536 = vunpack.c.l.b16 %v497
    %v537 = vunpack.c.l.b16 %v498
    %v538 = vunpack.c.l.b16 %v499
    %v539 = vunpack.c.l.b16 %v500
    %v540 = vunpack.c.l.b16 %v501
    %v541 = vunpack.c.l.b16 %v502
    %v542 = vunpack.c.l.b16 %v503
    %v543 = vunpack.c.l.b16 %v504
    %v544 = vunpack.c.l.b16 %v505
    %v545 = vunpack.c.l.b16 %v506
    %v546 = vunpack.c.l.b16 %v507
    %v547 = vunpack.c.l.b16 %v508
    %v548 = vpack.c.b16 %v533, %v532
    %v549 = vpack.c.b16 %v535, %v534
    %v550 = vpack.c.b16 %v537, %v536
    %v551 = vpack.c.b16 %v539, %v538
    %v552 = vpack.c.b16 %v541, %v540
    %v553 = vpack.c.b16 %v543, %v542
    %v554 = vpack.c.b16 %v545, %v544
    %v555 = vpack.c.b16 %v547, %v546
    %564 = vmatprep.subr.bf16.mxu0 0
    %565 = vmatpush1.bf16.msra.mxu0 %v555
    %566 = vmatprep.subr.bf16.mxu0 0
    %567 = vmatpush1.bf16.msra.mxu0 %v554
    %568 = vmatprep.subr.bf16.mxu0 0
    %569 = vmatpush1.bf16.msra.mxu0 %v553
    %570 = vmatprep.subr.bf16.mxu0 0
    %571 = vmatpush1.bf16.msra.mxu0 %v552
    %572 = vmatprep.subr.bf16.mxu0 0
    %573 = vmatpush1.bf16.msra.mxu0 %v551
    %574 = vmatprep.subr.bf16.mxu0 0
    %575 = vmatpush1.bf16.msra.mxu0 %v550
    %576 = vmatprep.subr.bf16.mxu0 0
    %577 = vmatpush1.bf16.msra.mxu0 %v549
    %578 = vmatprep.subr.bf16.mxu0 0
    %579 = vmatpush1.bf16.msra.mxu0 %v548
    %580 = vmatprep.subr.bf16.mxu0 0
    %581 = vmatpush2.bf16.msra.mxu0 0
    %582 = vmatprep.subr.bf16.mxu0 0
    %583 = vmatpush2.bf16.msra.mxu0 0
    %584 = vmatprep.subr.bf16.mxu0 0
    %585 = vmatpush2.bf16.msra.mxu0 0
    %586 = vmatprep.subr.bf16.mxu0 0
    %587 = vmatpush2.bf16.msra.mxu0 0
    %588 = vmatprep.subr.bf16.mxu0 0
    %589 = vmatpush2.bf16.msra.mxu0 0
    %590 = vmatprep.subr.bf16.mxu0 0
    %591 = vmatpush2.bf16.msra.mxu0 0
    %592 = vmatprep.subr.bf16.mxu0 0
    %593 = vmatpush2.bf16.msra.mxu0 0
    %594 = vmatprep.subr.bf16.mxu0 0
    %595 = vmatpush2.bf16.msra.mxu0 0
    %596 = vmatprep.mubr.bf16.mxu0 0
    %597 = vmatmul.mubr.bf16.gmra.mxu0 %v492
    %v598 = vpop.f32.mrf.mxu0
    %v599 = vadd.f32 %v514, %v598
    %v600 = vpop.f32.mrf.mxu0
    %v601 = vpop.f32.mrf.mxu0
    %v602 = vpop.f32.mrf.mxu0
    %603 = vdwg.mxu0
    %v604 = vxor.u32 %v599, 2147483648
    %v605 = vmul.f32 %v604, 1.442695
    %v606 = vpow.pop %v605
    %v607 = vadd.f32 %v606, 1.0
    %v608 = vrcp.pop %v607
    %v609 = vmul.f32 1.0, %v608
    %610 = vst [vmem:[#allocation7] sm:$0xff] %v609
    // Predicated region
    $region62: #{tpu_custom_call.1} parent=1 // pred_check
      _
    $region63: #{tpu_custom_call.1} parent=1 // pred_check_branch
      %612 = sbr.rel (0) target = $region65
    $region64: #{tpu_custom_call.1} parent=1 // pred_region
      %s614 = ssub.s32 128, 128
      %615 = vsyncadd [#allocation4], %s614
      %s617 = sshll.u32 [#allocation7], 4
      %s618 = int_to_ptr.vmem [resolvable:$true] %s617
      %620 = dma.vmem_to_hbm [thread:$0]  %s618, 128, %s13, [#allocation4]
    $region65: #{tpu_custom_call.1} parent=1 // pred_fallthru
      _
    // Predicated region
    $region66: #{tpu_custom_call.1} parent=1 // pred_check
      _
    $region67: #{tpu_custom_call.1} parent=1 // pred_check_branch
      %622 = sbr.rel (0) target = $region69
    $region68: #{tpu_custom_call.1} parent=1 // pred_region
      %623 = dma.done [#allocation4], 128
    $region69: #{tpu_custom_call.1} parent=1 // pred_fallthru
      _
    %624 = vsyncpa [#allocation3], 1
    %625 = vsyncpa [#allocation6], 1
    %626 = vsyncpa [#allocation4], 1

</llo_original>
